<compile_context>
chip_gen: v5e
topology: v5e:2x2
jax: 0.10.0
libtpu: 0.0.40
codegen_flags: <defaults>
</compile_context>

<pallas_src>
import jax
import jax.numpy as jnp
from jax.experimental import pallas as pl
from jax.experimental.pallas import tpu as pltpu

# Logical sizes from the PyTorch module.
IN_F = 10
OUT_F = 10
BATCH = 1

# Lane-dense padded tile sizes.
PAD_B = 8     # sublane-padded batch (min sublane tile)
PAD_K = 16    # padded contraction dim (>= IN_F); small to shrink the W slab
PAD_N = 128   # lane-padded output dim (min lane tile)


def _foo_linear_kernel(x_ref, w_ref, b_ref, y_ref):
    """Single-tile kernel: y = x @ W_t + b on lane-dense padded slabs.

    Padding rows/cols of x, W and b are zero, so the logical (1,10) result lives
    in y[0, :10]; the padded region of y is just the broadcast bias (sliced away
    by the wrapper).
    """
    y_ref[...] = (
        jnp.dot(x_ref[...], w_ref[...], preferred_element_type=jnp.float32)
        + b_ref[...]                                  # (1,128) broadcasts over sublanes
    )


def foo_linear(x_pad, w_pad, b_pad):
    """Gridless pallas_call: every operand is a single full-array VMEM block."""
    y_pad = pl.pallas_call(
        _foo_linear_kernel,
        out_shape=jax.ShapeDtypeStruct((PAD_B, PAD_N), jnp.float32),
        in_specs=[
            pl.BlockSpec(memory_space=pltpu.MemorySpace.VMEM),   # x, padded (8,16)
            pl.BlockSpec(memory_space=pltpu.MemorySpace.VMEM),   # W_t, padded (16,128)
            pl.BlockSpec(memory_space=pltpu.MemorySpace.VMEM),   # bias, padded (1,128)
        ],
        out_specs=pl.BlockSpec(memory_space=pltpu.MemorySpace.VMEM),
        cost_estimate=pl.CostEstimate(
            flops=2 * PAD_B * PAD_K * PAD_N,
            transcendentals=0,
            bytes_accessed=4 * (PAD_B * PAD_K + PAD_K * PAD_N + PAD_N + PAD_B * PAD_N),
        ),
    )(x_pad, w_pad, b_pad)
    return y_pad


def init_params(key):
    """nn.Linear-style init: uniform(-1/sqrt(in_features), 1/sqrt(in_features)).
    Weight transpose + lane-dense zero-padding are hoisted here (one-time cost)."""
    k_fw, k_fb, k_ow, k_ob = jax.random.split(key, 4)
    bound = 1.0 / jnp.sqrt(float(IN_F))

    foo_w = jax.random.uniform(k_fw, (OUT_F, IN_F), jnp.float32, -bound, bound)
    foo_b = jax.random.uniform(k_fb, (OUT_F,), jnp.float32, -bound, bound)
    # other_layer: defined in __init__ but unused in forward() (kept for parity).
    other_w = jax.random.uniform(k_ow, (OUT_F, IN_F), jnp.float32, -bound, bound)
    other_b = jax.random.uniform(k_ob, (OUT_F,), jnp.float32, -bound, bound)

    # Pre-transposed (in, out) and zero-padded to lane-dense slabs, once.
    w_pad = jnp.zeros((PAD_K, PAD_N), jnp.float32).at[:IN_F, :OUT_F].set(foo_w.T)
    b_pad = jnp.zeros((1, PAD_N), jnp.float32).at[0, :OUT_F].set(foo_b)

    return {
        "foo_w": foo_w, "foo_b": foo_b,
        "foo_w_pad": w_pad, "foo_b_pad": b_pad,
        "other_w": other_w, "other_b": other_b,
    }


def forward(params, rng_key):
    """ModelWithModuleDict.forward(): random (1,10) input through module['foo'].

    torch.rand's exact bit stream is not reproducible in JAX; a jax.random key
    is the stand-in (vary the key per call, like torch's advancing global state).
    Returns (x, y); x is returned only so the caller can verify y.
    """
    x = jax.random.uniform(rng_key, (BATCH, IN_F), jnp.float32)          # torch.rand(1,10)
    x_pad = jnp.zeros((PAD_B, PAD_K), jnp.float32).at[:BATCH, :IN_F].set(x)
    y_pad = foo_linear(x_pad, params["foo_w_pad"], params["foo_b_pad"])
    # Slice back to the logical shape outside the kernel (XLA fuses this).
    return x, y_pad[:BATCH, :OUT_F]


if __name__ == "__main__":
    root = jax.random.PRNGKey(0)
    k_params, k_input = jax.random.split(root)
    params = init_params(k_params)

    x, y = forward(params, k_input)
    x, y = jax.block_until_ready((x, y))

    # Sanity checks against a plain-JAX reference.
    assert x.shape == (1, 10) and y.shape == (1, 10)
    assert bool(jnp.all((x >= 0.0) & (x < 1.0)))          # uniform [0, 1)
    y_ref = x @ params["foo_w"].T + params["foo_b"]
    assert jnp.allclose(y, y_ref, atol=1e-5, rtol=1e-5)

    print("KERNEL_OK")
</pallas_src>

<mosaic_0001>
module attributes {stable_mosaic.version = 11 : i64} {
  func.func @_foo_linear_kernel(%arg0: memref<8x16xf32, #tpu.memory_space<vmem>>, %arg1: memref<16x128xf32, #tpu.memory_space<vmem>>, %arg2: memref<1x128xf32, #tpu.memory_space<vmem>>, %arg3: memref<8x128xf32, #tpu.memory_space<vmem>>) attributes {dimension_semantics = [], scalar_prefetch = 0 : i64, scratch_operands = 0 : i64, tpu.core_type = #tpu.core_type<tc>} {
    %c0 = arith.constant 0 : index
    %c0_0 = arith.constant 0 : index
    %0 = vector.load %arg0[%c0, %c0_0] : memref<8x16xf32, #tpu.memory_space<vmem>>, vector<8x16xf32>
    %c0_1 = arith.constant 0 : index
    %c0_2 = arith.constant 0 : index
    %1 = vector.load %arg1[%c0_1, %c0_2] : memref<16x128xf32, #tpu.memory_space<vmem>>, vector<16x128xf32>
    %cst = arith.constant dense<0.000000e+00> : vector<8x128xf32>
    %2 = tpu.matmul %0, %1, %cst {dimension_numbers = #tpu.dot_dimension_numbers<[1], [0], [0], [1], [0, 0, 1, 1], [], []>} : vector<8x16xf32>, vector<16x128xf32>, vector<8x128xf32> -> vector<8x128xf32>
    %c0_3 = arith.constant 0 : index
    %c0_4 = arith.constant 0 : index
    %3 = vector.load %arg2[%c0_3, %c0_4] : memref<1x128xf32, #tpu.memory_space<vmem>>, vector<1x128xf32>
    %4 = vector.broadcast %3 : vector<1x128xf32> to vector<8x128xf32>
    %5 = arith.addf %2, %4 : vector<8x128xf32>
    %c0_5 = arith.constant 0 : index
    %c0_6 = arith.constant 0 : index
    %6 = vector.load %arg3[%c0_5, %c0_6] : memref<8x128xf32, #tpu.memory_space<vmem>>, vector<8x128xf32>
    tpu.vector_store %arg3[%c0_5, %c0_6], %5 {strides = array<i32>} : memref<8x128xf32, #tpu.memory_space<vmem>>, vector<8x128xf32>,
    return
  }
}

</mosaic_0001>

<llo_original>
// kernel: tpu_custom_call.1
$region0: #{tpu_custom_call.1}
  #allocation0 [shape = 'u32[]', space=smem, size = 0x4, offset = 0x4, fixed_abs, tag = 'smem constant byte address 0x4 - core index']
  #allocation1 [shape = 'u32[72,128]{1,0:T(1,128)}', space=vmem, size = 0x9000, scoped, tag = 'internal scratch']
  %s0 = inlined_call_operand.hbm [shape: f32[8,16], index: 0, kind: input, shape index: {}]
  %s1 = inlined_call_operand.hbm [shape: f32[16,128], index: 1, kind: input, shape index: {}]
  %s2 = inlined_call_operand.vmem [shape: f32[1,128], index: 2, kind: input, shape index: {}]
  %s3 = inlined_call_operand.hbm [shape: f32[8,128], index: 3, kind: output, shape index: {}]
  %s4 = sld [smem:[#allocation0]]
  $region30: #{tpu_custom_call.1} parent=0
    _
  %s6 = ssub.s32 1, %s4
  %s7 = scalar_select 0, %s6, %s4
  $region1: #{tpu_custom_call.1} parent=0
    #allocation2 [shape = 'u8[4096]{0}', space=vmem, size = 0x1000, scoped, tag = 'input window, operand 0, single buffered']
    #allocation3 [shape = 's32[1]{0}', space=sflag, size = 0x4, scoped, tag = 'scoped memory for tpu_custom_call.1']
    #allocation4 [shape = 's32[1]{0}', space=sflag, size = 0x4, scoped, tag = 'scoped memory for tpu_custom_call.1']
    #allocation5 [shape = 'u8[8192]{0}', space=vmem, size = 0x2000, scoped, tag = 'input window, operand 1, single buffered']
    #allocation6 [shape = 's32[1]{0}', space=sflag, size = 0x4, scoped, tag = 'scoped memory for tpu_custom_call.1']
    #allocation7 [shape = 'u8[4096]{0}', space=vmem, size = 0x1000, scoped, tag = 'output window, operand 0, single buffered']
    %8 = vsyncpa [#allocation3], 0
    %9 = vsyncpa [#allocation6], 0
    %10 = vsyncpa [#allocation4], 0
    // Predicated region
    $region2: #{tpu_custom_call.1} parent=1 // pred_check
      _
    $region3: #{tpu_custom_call.1} parent=1 // pred_check_branch
      %12 = sbr.rel (0) target = $region5
    $region4: #{tpu_custom_call.1} parent=1 // pred_region
      %14 = vsyncadd [#allocation3], 0
      %s16 = sshll.u32 %s0, 4
      %s17 = int_to_ptr.hbm [resolvable:$true] %s16
      %s18 = sshll.u32 [#allocation2], 4
      %s19 = int_to_ptr.vmem [resolvable:$true] %s18
      %21 = dma.hbm_to_vmem [thread:$0]  %s17, 128, %s19, [#allocation3]
    $region5: #{tpu_custom_call.1} parent=1 // pred_fallthru
      _
    // Predicated region
    $region6: #{tpu_custom_call.1} parent=1 // pred_check
      _
    $region7: #{tpu_custom_call.1} parent=1 // pred_check_branch
      %23 = sbr.rel (0) target = $region9
    $region8: #{tpu_custom_call.1} parent=1 // pred_region
      %25 = vsyncadd [#allocation6], 0
      %s26 = sshll.u32 %s1, 4
      %s27 = int_to_ptr.hbm [resolvable:$true] %s26
      %s28 = sshll.u32 [#allocation5], 4
      %s29 = int_to_ptr.vmem [resolvable:$true] %s28
      %34 = dma.hbm_to_vmem [thread:$0]  %s27, 256, %s29, [#allocation6], 128, 128, 8
    $region9: #{tpu_custom_call.1} parent=1 // pred_fallthru
      _
    // Predicated region
    $region10: #{tpu_custom_call.1} parent=1 // pred_check
      _
    $region11: #{tpu_custom_call.1} parent=1 // pred_check_branch
      %36 = sbr.rel (0) target = $region13
    $region12: #{tpu_custom_call.1} parent=1 // pred_region
      _
    $region13: #{tpu_custom_call.1} parent=1 // pred_fallthru
      _
    // Predicated region
    $region14: #{tpu_custom_call.1} parent=1 // pred_check
      _
    $region15: #{tpu_custom_call.1} parent=1 // pred_check_branch
      %38 = sbr.rel (0) target = $region17
    $region16: #{tpu_custom_call.1} parent=1 // pred_region
      %40 = dma.done [#allocation3], 128
    $region17: #{tpu_custom_call.1} parent=1 // pred_fallthru
      _
    // Predicated region
    $region18: #{tpu_custom_call.1} parent=1 // pred_check
      _
    $region19: #{tpu_custom_call.1} parent=1 // pred_check_branch
      %42 = sbr.rel (0) target = $region21
    $region20: #{tpu_custom_call.1} parent=1 // pred_region
      %44 = dma.done [#allocation6], 256
    $region21: #{tpu_custom_call.1} parent=1 // pred_fallthru
      _
    %v45 = vld [vmem:[#allocation2] sm:$0xff]
    %v46 = vld [vmem:[#allocation5] sm:$0xff]
    %v47 = vld [vmem:[#allocation5 + $0x8] sm:$0xff]
    %v48 = vld [vmem:[%s2] sm:$0x1]
    %v50 = vperm.slane %v48, 0
    %vm52 = vcmask 130048
    %v54 = vsel %vm52, %v45, 0
    %56 = vmatpush.msra.mxu0 0.0
    %57 = vmatpush.msra.mxu0 0.0
    %58 = vmatpush.msra.mxu0 0.0
    %59 = vmatpush.msra.mxu0 0.0
    %60 = vmatpush.msra.mxu0 0.0
    %61 = vmatpush.msra.mxu0 0.0
    %62 = vmatpush.msra.mxu0 0.0
    %63 = vmatpush.msra.mxu0 0.0
    %64 = vmatpush.msra.mxu0 0.0
    %65 = vmatpush.msra.mxu0 0.0
    %66 = vmatpush.msra.mxu0 0.0
    %67 = vmatpush.msra.mxu0 0.0
    %68 = vmatpush.msra.mxu0 0.0
    %69 = vmatpush.msra.mxu0 0.0
    %70 = vmatpush.msra.mxu0 %v47
    %71 = vmatpush.msra.mxu0 %v46
    %72 = vmatmul.f32.gmra.mxu0 %v54
    %v73 = vpop.f32.mrf.mxu0
    %v74 = vadd.f32 %v50, %v73
    %75 = vdwg.mxu0
    %76 = vst [vmem:[#allocation7] sm:$0xff] %v74
    // Predicated region
    $region22: #{tpu_custom_call.1} parent=1 // pred_check
      _
    $region23: #{tpu_custom_call.1} parent=1 // pred_check_branch
      %78 = sbr.rel (0) target = $region25
    $region24: #{tpu_custom_call.1} parent=1 // pred_region
      %80 = vsyncadd [#allocation4], 0
      %s82 = sshll.u32 [#allocation7], 4
      %s83 = int_to_ptr.vmem [resolvable:$true] %s82
      %s84 = sshll.u32 %s3, 4
      %s85 = int_to_ptr.hbm [resolvable:$true] %s84
      %87 = dma.vmem_to_hbm [thread:$0]  %s83, 128, %s85, [#allocation4]
    $region25: #{tpu_custom_call.1} parent=1 // pred_fallthru
      _
    // Predicated region
    $region26: #{tpu_custom_call.1} parent=1 // pred_check
      _
    $region27: #{tpu_custom_call.1} parent=1 // pred_check_branch
      %89 = sbr.rel (0) target = $region29
    $region28: #{tpu_custom_call.1} parent=1 // pred_region
      %91 = dma.done [#allocation4], 128
    $region29: #{tpu_custom_call.1} parent=1 // pred_fallthru
      _
    %92 = vsyncpa [#allocation3], 1
    %93 = vsyncpa [#allocation6], 1
    %94 = vsyncpa [#allocation4], 1

</llo_original>
